<compile_context>
chip_gen: v7x
topology: tpu7x:2x2x1
jax: 0.10.0
libtpu: 0.0.40
codegen_flags: <defaults>
</compile_context>

<pallas_src>
import jax
import jax.numpy as jnp
from jax.experimental import pallas as pl
from jax.experimental.pallas import tpu as pltpu

HIDDEN = 32          # hidden width of each MLP
MAX_TILE_N = 2048    # upper bound on points per grid step (lane axis)


def parametrization_map_kernel(x_ref, lay1_ref, lay2_ref, lay3_ref, out_ref):
    """x_ref: (2, T) points (feature-major).  lay1: (2H, 4) = [A1 | b1 | b2],
    lay2: (2H, 2H) block-diag second layer, lay3: (8, 2H+1) = [A3 | b3].
    out_ref: (8, T) = rows 0:3 src3D, 3:5 mapped, 5:8 zero padding."""
    h2w = lay2_ref.shape[0]                        # 2H

    x = x_ref[...]                                 # (2, T)
    lay1 = lay1_ref[...]                           # (2H, 4)
    a1c0 = lay1[:, 0:1]                            # (2H, 1)
    a1c1 = lay1[:, 1:2]
    b1 = lay1[:, 2:3]
    b2 = lay1[:, 3:4]

    # 2 -> 2H layer on the VPU: two broadcast FMAs (no tiny K=2 MXU matmul).
    h1 = jnp.maximum(a1c0 * x[0:1, :] + a1c1 * x[1:2, :] + b1, 0.0)   # (2H, T)

    # fused block-diagonal 2H -> 2H layer on the MXU (points = free/lane dim).
    h2 = jnp.maximum(
        jnp.dot(lay2_ref[...], h1, preferred_element_type=jnp.float32) + b2,
        0.0)                                                           # (2H, T)

    # fused block-diagonal 2H -> 8 output layer; single lane-dense store.
    lay3 = lay3_ref[...]                           # (8, 2H+1)
    out_ref[...] = (
        jnp.dot(lay3[:, :h2w], h2, preferred_element_type=jnp.float32)
        + lay3[:, h2w:h2w + 1])                                        # (8, T)


def _pack_params(src_p, map_p):
    """Pack both MLPs into 3 small arrays for a fused block-diagonal network."""
    W1s, b1s, W2s, b2s, W3s, b3s = src_p
    W1m, b1m, W2m, b2m, W3m, b3m = map_p
    H = W1s.shape[1]
    H2 = 2 * H
    d_src = W3s.shape[1]     # 3
    d_map = W3m.shape[1]     # 2

    A1 = jnp.concatenate([W1s.T, W1m.T], axis=0)                       # (2H, 2)
    B1 = jnp.concatenate([b1s.reshape(H, 1), b1m.reshape(H, 1)], 0)    # (2H, 1)
    B2 = jnp.concatenate([b2s.reshape(H, 1), b2m.reshape(H, 1)], 0)    # (2H, 1)
    lay1 = jnp.concatenate([A1, B1, B2], axis=1)                       # (2H, 4)

    lay2 = jnp.zeros((H2, H2), jnp.float32)
    lay2 = lay2.at[:H, :H].set(W2s.T).at[H:, H:].set(W2m.T)            # (2H, 2H)

    A3 = jnp.zeros((8, H2), jnp.float32)
    A3 = A3.at[:d_src, :H].set(W3s.T)
    A3 = A3.at[d_src:d_src + d_map, H:].set(W3m.T)                     # (8, 2H)
    B3 = jnp.zeros((8, 1), jnp.float32)
    B3 = B3.at[:d_src, :].set(b3s.reshape(d_src, 1))
    B3 = B3.at[d_src:d_src + d_map, :].set(b3m.reshape(d_map, 1))
    lay3 = jnp.concatenate([A3, B3], axis=1)                           # (8, 2H+1)

    return lay1, lay2, lay3, d_src, d_map


def parametrization_map_forward(points2D, src_params, map_params, *,
                                tile_n=None):
    """points2D: (N, 2) f32.  Returns (mapped_points (N,2), points3D_source (N,3))."""
    N = points2D.shape[0]
    if tile_n is None:
        # Big tiles amortize the ~0.35us per-step overhead that dominates this
        # tiny network; keep >= 2 grid steps when possible for megacore.
        tile_n = max(256, min(MAX_TILE_N, pl.next_power_of_2(pl.cdiv(N, 2))))
    n_pad = pl.cdiv(N, tile_n) * tile_n
    lay1, lay2, lay3, d_src, d_map = _pack_params(src_params, map_params)
    H2 = lay2.shape[0]

    # feature-major, zero-padded input: (2, n_pad), points on the lane axis.
    x_t = jnp.zeros((2, n_pad), jnp.float32).at[:, :N].set(points2D.T)

    flops_per_pt = 2 * (2 * H2 + H2 * H2 + H2 * 8)
    param_bytes = 4 * (lay1.size + lay2.size + lay3.size)
    out = pl.pallas_call(
        parametrization_map_kernel,
        out_shape=jax.ShapeDtypeStruct((8, n_pad), jnp.float32),
        grid_spec=pltpu.PrefetchScalarGridSpec(
            num_scalar_prefetch=0,
            grid=(n_pad // tile_n,),
            in_specs=[
                pl.BlockSpec((2, tile_n), lambda i: (0, i)),       # points
                pl.BlockSpec(lay1.shape, lambda i: (0, 0)),        # layer-1 pack
                pl.BlockSpec(lay2.shape, lambda i: (0, 0)),        # layer-2 pack
                pl.BlockSpec(lay3.shape, lambda i: (0, 0)),        # layer-3 pack
            ],
            out_specs=pl.BlockSpec((8, tile_n), lambda i: (0, i)),
        ),
        compiler_params=pltpu.CompilerParams(
            dimension_semantics=("parallel",)),
        cost_estimate=pl.CostEstimate(
            flops=int(n_pad) * int(flops_per_pt),
            transcendentals=0,
            bytes_accessed=int(n_pad) * (2 + 8) * 4 + int(param_bytes)),
    )(x_t, lay1, lay2, lay3)

    points3D_source = out[:d_src, :N].T                 # (N, 3)
    mapped_points = out[d_src:d_src + d_map, :N].T      # (N, 2)
    return mapped_points, points3D_source


# ----------------------------- test harness ---------------------------------

def _init_mlp(key, d_in, d_hidden, d_out):
    ks = jax.random.split(key, 6)
    scale = 0.5
    W1 = scale * jax.random.normal(ks[0], (d_in, d_hidden), jnp.float32)
    b1 = scale * jax.random.normal(ks[1], (1, d_hidden), jnp.float32)
    W2 = scale * jax.random.normal(ks[2], (d_hidden, d_hidden), jnp.float32)
    b2 = scale * jax.random.normal(ks[3], (1, d_hidden), jnp.float32)
    W3 = scale * jax.random.normal(ks[4], (d_hidden, d_out), jnp.float32)
    b3 = scale * jax.random.normal(ks[5], (1, d_out), jnp.float32)
    return (W1, b1, W2, b2, W3, b3)


def _mlp3_ref(x, p):
    W1, b1, W2, b2, W3, b3 = p
    h = jnp.maximum(x @ W1 + b1, 0.0)
    h = jnp.maximum(h @ W2 + b2, 0.0)
    return h @ W3 + b3


if __name__ == "__main__":
    key = jax.random.PRNGKey(0)
    k_pts, k_src, k_map = jax.random.split(key, 3)

    N = 1000                                             # not a tile multiple
    points2D = jax.random.uniform(k_pts, (N, 2), jnp.float32, -1.0, 1.0)

    # deterministic "loaded" weights (synthetic, no checkpoint files)
    src_params = _init_mlp(k_src, 2, HIDDEN, 3)          # source_surface
    map_params = _init_mlp(k_map, 2, HIDDEN, 2)          # neural_map

    mapped, p3d_src = jax.block_until_ready(
        parametrization_map_forward(points2D, src_params, map_params))

    # pure-JAX reference for sanity
    src_ref = _mlp3_ref(points2D, src_params)
    map_ref = _mlp3_ref(points2D, map_params)

    assert mapped.shape == (N, 2) and p3d_src.shape == (N, 3)
    assert jnp.allclose(mapped, map_ref, atol=1e-3, rtol=1e-3)
    assert jnp.allclose(p3d_src, src_ref, atol=1e-3, rtol=1e-3)

    print("KERNEL_OK")
</pallas_src>

<mosaic_0001>
module attributes {stable_mosaic.version = 11 : i64} {
  func.func @parametrization_map_kernel(%arg0: i32, %arg1: memref<2x512xf32, #tpu.memory_space<vmem>>, %arg2: memref<64x4xf32, #tpu.memory_space<vmem>>, %arg3: memref<64x64xf32, #tpu.memory_space<vmem>>, %arg4: memref<8x65xf32, #tpu.memory_space<vmem>>, %arg5: memref<8x512xf32, #tpu.memory_space<vmem>>) attributes {dimension_semantics = [#tpu.dimension_semantics<parallel>], iteration_bounds = array<i64: 2>, scalar_prefetch = 0 : i64, scratch_operands = 0 : i64, tpu.core_type = #tpu.core_type<tc>, window_params = [{transform_indices = @transform_0, window_bounds = array<i64: 2, 512>}, {pipeline_mode = #tpu.pipeline_mode<synchronous>, transform_indices = @transform_1, window_bounds = array<i64: 64, 4>}, {pipeline_mode = #tpu.pipeline_mode<synchronous>, transform_indices = @transform_2, window_bounds = array<i64: 64, 64>}, {pipeline_mode = #tpu.pipeline_mode<synchronous>, transform_indices = @transform_3, window_bounds = array<i64: 8, 65>}, {transform_indices = @transform_4, window_bounds = array<i64: 8, 512>}]} {
    %c0 = arith.constant 0 : index
    %c0_0 = arith.constant 0 : index
    %0 = vector.load %arg1[%c0, %c0_0] : memref<2x512xf32, #tpu.memory_space<vmem>>, vector<2x512xf32>
    %c0_1 = arith.constant 0 : index
    %c0_2 = arith.constant 0 : index
    %1 = vector.load %arg2[%c0_1, %c0_2] : memref<64x4xf32, #tpu.memory_space<vmem>>, vector<64x4xf32>
    %2 = vector.extract_strided_slice %1 {offsets = [0, 0], sizes = [64, 1], strides = [1, 1]} : vector<64x4xf32> to vector<64x1xf32>
    %3 = vector.extract_strided_slice %1 {offsets = [0, 1], sizes = [64, 1], strides = [1, 1]} : vector<64x4xf32> to vector<64x1xf32>
    %4 = vector.extract_strided_slice %1 {offsets = [0, 2], sizes = [64, 1], strides = [1, 1]} : vector<64x4xf32> to vector<64x1xf32>
    %5 = vector.extract_strided_slice %1 {offsets = [0, 3], sizes = [64, 1], strides = [1, 1]} : vector<64x4xf32> to vector<64x1xf32>
    %6 = vector.extract_strided_slice %0 {offsets = [0, 0], sizes = [1, 512], strides = [1, 1]} : vector<2x512xf32> to vector<1x512xf32>
    %7 = vector.broadcast %2 : vector<64x1xf32> to vector<64x512xf32>
    %8 = vector.broadcast %6 : vector<1x512xf32> to vector<64x512xf32>
    %9 = arith.mulf %7, %8 : vector<64x512xf32>
    %10 = vector.extract_strided_slice %0 {offsets = [1, 0], sizes = [1, 512], strides = [1, 1]} : vector<2x512xf32> to vector<1x512xf32>
    %11 = vector.broadcast %3 : vector<64x1xf32> to vector<64x512xf32>
    %12 = vector.broadcast %10 : vector<1x512xf32> to vector<64x512xf32>
    %13 = arith.mulf %11, %12 : vector<64x512xf32>
    %14 = arith.addf %9, %13 : vector<64x512xf32>
    %15 = vector.broadcast %4 : vector<64x1xf32> to vector<64x512xf32>
    %16 = arith.addf %14, %15 : vector<64x512xf32>
    %cst = arith.constant 0.000000e+00 : f32
    %17 = vector.broadcast %cst : f32 to vector<64x512xf32>
    %18 = arith.maximumf %16, %17 : vector<64x512xf32>
    %c0_3 = arith.constant 0 : index
    %c0_4 = arith.constant 0 : index
    %19 = vector.load %arg3[%c0_3, %c0_4] : memref<64x64xf32, #tpu.memory_space<vmem>>, vector<64x64xf32>
    %cst_5 = arith.constant dense<0.000000e+00> : vector<64x512xf32>
    %20 = tpu.matmul %19, %18, %cst_5 {dimension_numbers = #tpu.dot_dimension_numbers<[1], [0], [0], [1], [0, 0, 1, 1], [], []>} : vector<64x64xf32>, vector<64x512xf32>, vector<64x512xf32> -> vector<64x512xf32>
    %21 = vector.broadcast %5 : vector<64x1xf32> to vector<64x512xf32>
    %22 = arith.addf %20, %21 : vector<64x512xf32>
    %cst_6 = arith.constant 0.000000e+00 : f32
    %23 = vector.broadcast %cst_6 : f32 to vector<64x512xf32>
    %24 = arith.maximumf %22, %23 : vector<64x512xf32>
    %c0_7 = arith.constant 0 : index
    %c0_8 = arith.constant 0 : index
    %25 = vector.load %arg4[%c0_7, %c0_8] : memref<8x65xf32, #tpu.memory_space<vmem>>, vector<8x65xf32>
    %26 = vector.extract_strided_slice %25 {offsets = [0, 0], sizes = [8, 64], strides = [1, 1]} : vector<8x65xf32> to vector<8x64xf32>
    %cst_9 = arith.constant dense<0.000000e+00> : vector<8x512xf32>
    %27 = tpu.matmul %26, %24, %cst_9 {dimension_numbers = #tpu.dot_dimension_numbers<[1], [0], [0], [1], [0, 0, 1, 1], [], []>} : vector<8x64xf32>, vector<64x512xf32>, vector<8x512xf32> -> vector<8x512xf32>
    %28 = vector.extract_strided_slice %25 {offsets = [0, 64], sizes = [8, 1], strides = [1, 1]} : vector<8x65xf32> to vector<8x1xf32>
    %29 = vector.broadcast %28 : vector<8x1xf32> to vector<8x512xf32>
    %30 = arith.addf %27, %29 : vector<8x512xf32>
    %c0_10 = arith.constant 0 : index
    %c0_11 = arith.constant 0 : index
    %31 = vector.load %arg5[%c0_10, %c0_11] : memref<8x512xf32, #tpu.memory_space<vmem>>, vector<8x512xf32>
    tpu.vector_store %arg5[%c0_10, %c0_11], %30 {strides = array<i32>} : memref<8x512xf32, #tpu.memory_space<vmem>>, vector<8x512xf32>,
    return
  }
  func.func @transform_0(%arg0: i32) -> (i32, i32) {
    %c0_i32 = arith.constant 0 : i32
    %c0_i32_0 = arith.constant 0 : i32
    return %c0_i32, %arg0 : i32, i32
  }
  func.func @transform_1(%arg0: i32) -> (i32, i32) {
    %c0_i32 = arith.constant 0 : i32
    %c0_i32_0 = arith.constant 0 : i32
    %c0_i32_1 = arith.constant 0 : i32
    return %c0_i32, %c0_i32_0 : i32, i32
  }
  func.func @transform_2(%arg0: i32) -> (i32, i32) {
    %c0_i32 = arith.constant 0 : i32
    %c0_i32_0 = arith.constant 0 : i32
    %c0_i32_1 = arith.constant 0 : i32
    return %c0_i32, %c0_i32_0 : i32, i32
  }
  func.func @transform_3(%arg0: i32) -> (i32, i32) {
    %c0_i32 = arith.constant 0 : i32
    %c0_i32_0 = arith.constant 0 : i32
    %c0_i32_1 = arith.constant 0 : i32
    return %c0_i32, %c0_i32_0 : i32, i32
  }
  func.func @transform_4(%arg0: i32) -> (i32, i32) {
    %c0_i32 = arith.constant 0 : i32
    %c0_i32_0 = arith.constant 0 : i32
    return %c0_i32, %arg0 : i32, i32
  }
}

</mosaic_0001>

<llo_original>
// kernel: tpu_custom_call.1
$region0: #{tpu_custom_call.1}
  #allocation0 [shape = 'u32[]', space=smem, size = 0x4, offset = 0x4, fixed_abs, tag = 'smem constant byte address 0x4 - core index']
  #allocation1 [shape = 'u32[144,128]{1,0:T(1,128)}', space=vmem, size = 0x12000, scoped, tag = 'internal scratch']
  %s0 = inlined_call_operand.hbm [shape: f32[2,1024], index: 0, kind: input, shape index: {}]
  %s1 = inlined_call_operand.vmem [shape: f32[64,4], index: 1, kind: input, shape index: {}]
  %s2 = inlined_call_operand.vmem [shape: f32[64,64], index: 2, kind: input, shape index: {}]
  %s3 = inlined_call_operand.vmem [shape: f32[8,65], index: 3, kind: input, shape index: {}]
  %s4 = inlined_call_operand.hbm [shape: f32[8,1024], index: 4, kind: output, shape index: {}]
  %s5 = sld [smem:[#allocation0]]
  $region53: #{tpu_custom_call.1} parent=0
    _
  %s7 = ssub.s32 1, %s5
  %s8 = scalar_select 0, %s7, %s5
  $region1: #{tpu_custom_call.1} parent=0
    #allocation2 [shape = 'u8[8192]{0}', space=vmem, size = 0x2000, scoped, tag = 'input window, operand 0']
    #allocation3 [shape = 's32[2]{0}', space=sflag, size = 0x8, scoped, tag = 'scoped memory for tpu_custom_call.1']
    #allocation4 [shape = 's32[2]{0}', space=sflag, size = 0x8, scoped, tag = 'scoped memory for tpu_custom_call.1']
    #allocation5 [shape = 'u8[32768]{0}', space=vmem, size = 0x8000, scoped, tag = 'output window, operand 0']
    %9 = vsyncpa [#allocation3], 0
    %s10 = scalar_lea.sflag [#allocation3], 1
    %11 = vsyncpa %s10, 0
    %12 = vsyncpa [#allocation4], 0
    %s13 = scalar_lea.sflag [#allocation4], 1
    %14 = vsyncpa %s13, 0
    loop: start=0, step=1, limit=4
    $region2: #{tpu_custom_call.1} parent=1 // loop_pre_header
      _
    $region3: #{tpu_custom_call.1} parent=1 // loop_header
      %s16 = sphi 0, %s20
      %p17 = scmp.ge.s32.totalorder %s16, 4
      %s26 = sphi 0, %s28
      %s29 = sphi 0, %s26
      %s30 = sphi 0, %s29
      %s46 = sphi 0, %s30
      %s50 = sphi 0, %s50
      %s52 = sphi 0, %s50
      %s53 = sphi 0, %s52
      %s67 = sphi 0, %s53
      %s71 = sphi 0, %s71
      %s73 = sphi 0, %s71
      %s74 = sphi 0, %s73
      %s88 = sphi 0, %s74
      %s92 = sphi 0, %s92
      %s94 = sphi 0, %s92
      %s95 = sphi 0, %s94
      %s109 = sphi 0, %s95
      %s115 = sphi 0, %s117
      %s118 = sphi 0, %s115
      %s119 = sphi 0, %s118
      %s135 = sphi 0, %s119
    $region4: #{tpu_custom_call.1} parent=1 // loop_header_branch
      %19 = sbr.rel (%p17) target = $region8
    $region5: #{tpu_custom_call.1} parent=1 // loop_body
      %s21 = ssub.s32 %s16, 1
      %s22 = ssub.s32 %s16, 2
      %s23 = sadd.s32 %s16, 1
      %s24 = ssub.s32 %s16, %s23
      %p25 = scmp.eq.s32.totalorder %s24, 0
      %s27 = sadd.s32 %s26, 1
      %s28 = scalar_select %p25, %s26, %s27
      %p31 = pneg %p25
      %p32 = scmp.eq.s32.totalorder %s16, 1
      %p33 = por %p31, %p32
      %p34 = scmp.ne.s32.totalorder %s26, %s29
      %p35 = scmp.eq.s32.totalorder %s16, 0
      %p36 = por %p34, %p35
      %p37 = scmp.ne.s32.totalorder %s26, %s29
      %p38 = scmp.eq.s32.totalorder %s21, 1
      %p39 = por %p37, %p38
      %p40 = scmp.ne.s32.totalorder %s29, %s30
      %p41 = scmp.eq.s32.totalorder %s21, 0
      %p42 = por %p40, %p41
      %p43 = scmp.ne.s32.totalorder %s29, %s30
      %p44 = scmp.eq.s32.totalorder %s22, 1
      %p45 = por %p43, %p44
      %p47 = scmp.ne.s32.totalorder %s30, %s46
      %p48 = scmp.eq.s32.totalorder %s22, 0
      %p49 = por %p47, %p48
      %s51 = sadd.s32 %s50, 1
      %p54 = scmp.eq.s32.totalorder %s16, 1
      %p55 = scmp.ne.s32.totalorder %s50, %s52
      %p56 = scmp.eq.s32.totalorder %s16, 0
      %p57 = por %p55, %p56
      %p58 = scmp.ne.s32.totalorder %s50, %s52
      %p59 = scmp.eq.s32.totalorder %s21, 1
      %p60 = por %p58, %p59
      %p61 = scmp.ne.s32.totalorder %s52, %s53
      %p62 = scmp.eq.s32.totalorder %s21, 0
      %p63 = por %p61, %p62
      %p64 = scmp.ne.s32.totalorder %s52, %s53
      %p65 = scmp.eq.s32.totalorder %s22, 1
      %p66 = por %p64, %p65
      %p68 = scmp.ne.s32.totalorder %s53, %s67
      %p69 = scmp.eq.s32.totalorder %s22, 0
      %p70 = por %p68, %p69
      %s72 = sadd.s32 %s71, 1
      %p75 = scmp.eq.s32.totalorder %s16, 1
      %p76 = scmp.ne.s32.totalorder %s71, %s73
      %p77 = scmp.eq.s32.totalorder %s16, 0
      %p78 = por %p76, %p77
      %p79 = scmp.ne.s32.totalorder %s71, %s73
      %p80 = scmp.eq.s32.totalorder %s21, 1
      %p81 = por %p79, %p80
      %p82 = scmp.ne.s32.totalorder %s73, %s74
      %p83 = scmp.eq.s32.totalorder %s21, 0
      %p84 = por %p82, %p83
      %p85 = scmp.ne.s32.totalorder %s73, %s74
      %p86 = scmp.eq.s32.totalorder %s22, 1
      %p87 = por %p85, %p86
      %p89 = scmp.ne.s32.totalorder %s74, %s88
      %p90 = scmp.eq.s32.totalorder %s22, 0
      %p91 = por %p89, %p90
      %s93 = sadd.s32 %s92, 1
      %p96 = scmp.eq.s32.totalorder %s16, 1
      %p97 = scmp.ne.s32.totalorder %s92, %s94
      %p98 = scmp.eq.s32.totalorder %s16, 0
      %p99 = por %p97, %p98
      %p100 = scmp.ne.s32.totalorder %s92, %s94
      %p101 = scmp.eq.s32.totalorder %s21, 1
      %p102 = por %p100, %p101
      %p103 = scmp.ne.s32.totalorder %s94, %s95
      %p104 = scmp.eq.s32.totalorder %s21, 0
      %p105 = por %p103, %p104
      %p106 = scmp.ne.s32.totalorder %s94, %s95
      %p107 = scmp.eq.s32.totalorder %s22, 1
      %p108 = por %p106, %p107
      %p110 = scmp.ne.s32.totalorder %s95, %s109
      %p111 = scmp.eq.s32.totalorder %s22, 0
      %p112 = por %p110, %p111
      %s113 = ssub.s32 %s16, %s23
      %p114 = scmp.eq.s32.totalorder %s113, 0
      %s116 = sadd.s32 %s115, 1
      %s117 = scalar_select %p114, %s115, %s116
      %p120 = pneg %p114
      %p121 = scmp.eq.s32.totalorder %s16, 1
      %p122 = por %p120, %p121
      %p123 = scmp.ne.s32.totalorder %s115, %s118
      %p124 = scmp.eq.s32.totalorder %s16, 0
      %p125 = por %p123, %p124
      %p126 = scmp.ne.s32.totalorder %s115, %s118
      %p127 = scmp.eq.s32.totalorder %s21, 1
      %p128 = por %p126, %p127
      %p129 = scmp.ne.s32.totalorder %s118, %s119
      %p130 = scmp.eq.s32.totalorder %s21, 0
      %p131 = por %p129, %p130
      %p132 = scmp.ne.s32.totalorder %s118, %s119
      %p133 = scmp.eq.s32.totalorder %s22, 1
      %p134 = por %p132, %p133
      %p136 = scmp.ne.s32.totalorder %s119, %s135
      %p137 = scmp.eq.s32.totalorder %s22, 0
      %p138 = por %p136, %p137
      %p139 = scmp.le.s32.totalorder 1, %s16
      %p140 = scmp.lt.s32.totalorder %s16, 3
      %p141 = pnand %p139, %p140
      %p142 = pneg %p141
      // Predicated region
      $region9: #{tpu_custom_call.1} parent=5 // pred_check
        _
      $region10: #{tpu_custom_call.1} parent=5 // pred_check_branch
        %144 = sbr.rel (%p141) target = $region12
      $region11: #{tpu_custom_call.1} parent=5 // pred_region
        %s145 = ssub.s32 %s16, 1
        // Predicated region
        $region13: #{tpu_custom_call.1} parent=11 // pred_check
          %p146 = pneg %p63
        $region14: #{tpu_custom_call.1} parent=11 // pred_check_branch
          %148 = sbr.rel (%p146) target = $region16
        $region15: #{tpu_custom_call.1} parent=11 // pred_region
          _
        $region16: #{tpu_custom_call.1} parent=11 // pred_fallthru
          _
        // Predicated region
        $region17: #{tpu_custom_call.1} parent=11 // pred_check
          %p149 = pneg %p84
        $region18: #{tpu_custom_call.1} parent=11 // pred_check_branch
          %151 = sbr.rel (%p149) target = $region20
        $region19: #{tpu_custom_call.1} parent=11 // pred_region
          _
        $region20: #{tpu_custom_call.1} parent=11 // pred_fallthru
          _
        // Predicated region
        $region21: #{tpu_custom_call.1} parent=11 // pred_check
          %p152 = pneg %p105
        $region22: #{tpu_custom_call.1} parent=11 // pred_check_branch
          %154 = sbr.rel (%p152) target = $region24
        $region23: #{tpu_custom_call.1} parent=11 // pred_region
          _
        $region24: #{tpu_custom_call.1} parent=11 // pred_fallthru
          _
      $region12: #{tpu_custom_call.1} parent=5 // pred_fallthru
        _
      %p155 = scmp.lt.s32.totalorder %s16, 2
      // Predicated region
      $region25: #{tpu_custom_call.1} parent=5 // pred_check
        %p156 = pneg %p155
      $region26: #{tpu_custom_call.1} parent=5 // pred_check_branch
        %158 = sbr.rel (%p156) target = $region28
      $region27: #{tpu_custom_call.1} parent=5 // pred_region
        // Predicated region
        $region29: #{tpu_custom_call.1} parent=27 // pred_check
          %p159 = pneg %p36
        $region30: #{tpu_custom_call.1} parent=27 // pred_check_branch
          %161 = sbr.rel (%p159) target = $region32
        $region31: #{tpu_custom_call.1} parent=27 // pred_region
          %s162 = sand.u32 %s26, 1
          %s163 = scalar_lea.sflag [#allocation3], %s162
          %s164 = sand.u32 %s26, 1
          %s165 = smul.addr %s164, 8
          %s166 = scalar_lea.vmem [#allocation2], %s165
          %s167 = smul.u32 4, %s16
          %s169 = ssub.s32 128, 128
          %170 = vsyncadd %s163, %s169
          %s171 = smul.addr %s167, 32
          %s172 = scalar_lea.hbm %s0, %s171
          %s174 = sshll.u32 %s166, 4
          %s175 = int_to_ptr.vmem [resolvable:$true] %s174
          %177 = dma.hbm_to_vmem [thread:$0]  %s172, 128, %s175, %s163
        $region32: #{tpu_custom_call.1} parent=27 // pred_fallthru
          _
      $region28: #{tpu_custom_call.1} parent=5 // pred_fallthru
        _
      %p178 = scmp.le.s32.totalorder 1, %s16
      %p179 = scmp.lt.s32.totalorder %s16, 3
      %p180 = pnand %p178, %p179
      %p181 = pneg %p180
      // Predicated region
      $region33: #{tpu_custom_call.1} parent=5 // pred_check
        _
      $region34: #{tpu_custom_call.1} parent=5 // pred_check_branch
        %183 = sbr.rel (%p180) target = $region36
      $region35: #{tpu_custom_call.1} parent=5 // pred_region
        %s184 = ssub.s32 %s16, 1
        %s185 = sand.u32 %s29, 1
        %s186 = scalar_lea.sflag [#allocation3], %s185
        %s187 = sand.u32 %s29, 1
        %s188 = smul.addr %s187, 8
        %s189 = scalar_lea.vmem [#allocation2], %s188
        // Predicated region
        $region37: #{tpu_custom_call.1} parent=35 // pred_check
          %p190 = pneg %p42
        $region38: #{tpu_custom_call.1} parent=35 // pred_check_branch
          %192 = sbr.rel (%p190) target = $region40
        $region39: #{tpu_custom_call.1} parent=35 // pred_region
          %193 = dma.done %s186, 128
        $region40: #{tpu_custom_call.1} parent=35 // pred_fallthru
          _
        %s194 = sand.u32 %s29, 1
        %s195 = scalar_lea.sflag [#allocation3], %s194
        %s196 = sand.u32 %s29, 1
        %s197 = smul.addr %s196, 8
        %s198 = scalar_lea.vmem [#allocation2], %s197
        %p199 = pneg %p42
        %p200 = pneg %p39
        %p201 = pneg %p63
        %p202 = pneg %p60
        %p203 = pneg %p84
        %p204 = pneg %p81
        %p205 = pneg %p105
        %p206 = pneg %p102
        %p207 = pneg %p131
        %p208 = pneg %p128
        %s209 = sand.u32 %s118, 1
        %s210 = scalar_lea.sflag [#allocation4], %s209
        %s211 = sand.u32 %s118, 1
        %s212 = smul.addr %s211, 32
        %s213 = scalar_lea.vmem [#allocation5], %s212
        %s214 = smul.u32 4, %s21
        %s215 = smul.u32 4, %s21
        %v216 = vld [vmem:[%s189] sm:$0xff]
        %v217 = vld [vmem:[%s1] sm:$0xff]
        %v218 = vld [vmem:[%s1 + $0x8] sm:$0xff]
        %v219 = vld [vmem:[%s1 + $0x10] sm:$0xff]
        %v220 = vld [vmem:[%s1 + $0x18] sm:$0xff]
        %v221 = vld [vmem:[%s1 + $0x20] sm:$0xff]
        %v222 = vld [vmem:[%s1 + $0x28] sm:$0xff]
        %v223 = vld [vmem:[%s1 + $0x30] sm:$0xff]
        %v224 = vld [vmem:[%s1 + $0x38] sm:$0xff]
        %226 = vset.pattern.permute.xlu0 0
        %227 = vperm.xlu0 %226, %v217
        %v228 = vpop.permute.xlu0 %227
        %231 = vset.pattern.permute.xlu0 0
        %232 = vperm.xlu0 %231, %v218
        %v233 = vpop.permute.xlu0 %232
        %236 = vset.pattern.permute.xlu0 0
        %237 = vperm.xlu0 %236, %v219
        %v238 = vpop.permute.xlu0 %237
        %241 = vset.pattern.permute.xlu0 0
        %242 = vperm.xlu0 %241, %v220
        %v243 = vpop.permute.xlu0 %242
        %246 = vset.pattern.permute.xlu0 0
        %247 = vperm.xlu0 %246, %v221
        %v248 = vpop.permute.xlu0 %247
        %251 = vset.pattern.permute.xlu0 0
        %252 = vperm.xlu0 %251, %v222
        %v253 = vpop.permute.xlu0 %252
        %256 = vset.pattern.permute.xlu0 0
        %257 = vperm.xlu0 %256, %v223
        %v258 = vpop.permute.xlu0 %257
        %261 = vset.pattern.permute.xlu0 0
        %262 = vperm.xlu0 %261, %v224
        %v263 = vpop.permute.xlu0 %262
        %v266 = vlaneseq
        %v267 = vshrl.u32 %v266, 7
        %v268 = vsub.s32 0, %v267
        %v269 = vrot.slane %v216, %v268
        %v270 = vlaneseq
        %v271 = vshrl.u32 %v270, 7
        %v272 = vsub.s32 2, %v271
        %v273 = vrot.slane %v216, %v272
        %v274 = vlaneseq
        %v275 = vshrl.u32 %v274, 7
        %v276 = vsub.s32 4, %v275
        %v277 = vrot.slane %v216, %v276
        %v278 = vlaneseq
        %v279 = vshrl.u32 %v278, 7
        %v280 = vsub.s32 6, %v279
        %v281 = vrot.slane %v216, %v280
        %v286 = vlaneseq
        %v287 = vshrl.u32 %v286, 7
        %v288 = vsub.s32 0, %v287
        %v289 = vrot.slane %v269, %v288
        %v290 = vlaneseq
        %v291 = vshrl.u32 %v290, 7
        %v292 = vsub.s32 0, %v291
        %v293 = vrot.slane %v273, %v292
        %v294 = vlaneseq
        %v295 = vshrl.u32 %v294, 7
        %v296 = vsub.s32 0, %v295
        %v297 = vrot.slane %v277, %v296
        %v298 = vlaneseq
        %v299 = vshrl.u32 %v298, 7
        %v300 = vsub.s32 0, %v299
        %v301 = vrot.slane %v281, %v300
        %v302 = vmul.f32 %v228, %v289
        %v303 = vmul.f32 %v228, %v293
        %v304 = vmul.f32 %v228, %v297
        %v305 = vmul.f32 %v228, %v301
        %v306 = vmul.f32 %v233, %v289
        %v307 = vmul.f32 %v233, %v293
        %v308 = vmul.f32 %v233, %v297
        %v309 = vmul.f32 %v233, %v301
        %v310 = vmul.f32 %v238, %v289
        %v311 = vmul.f32 %v238, %v293
        %v312 = vmul.f32 %v238, %v297
        %v313 = vmul.f32 %v238, %v301
        %v314 = vmul.f32 %v243, %v289
        %v315 = vmul.f32 %v243, %v293
        %v316 = vmul.f32 %v243, %v297
        %v317 = vmul.f32 %v243, %v301
        %v318 = vmul.f32 %v248, %v289
        %v319 = vmul.f32 %v248, %v293
        %v320 = vmul.f32 %v248, %v297
        %v321 = vmul.f32 %v248, %v301
        %v322 = vmul.f32 %v253, %v289
        %v323 = vmul.f32 %v253, %v293
        %v324 = vmul.f32 %v253, %v297
        %v325 = vmul.f32 %v253, %v301
        %v326 = vmul.f32 %v258, %v289
        %v327 = vmul.f32 %v258, %v293
        %v328 = vmul.f32 %v258, %v297
        %v329 = vmul.f32 %v258, %v301
        %v330 = vmul.f32 %v263, %v289
        %v331 = vmul.f32 %v263, %v293
        %v332 = vmul.f32 %v263, %v297
        %v333 = vmul.f32 %v263, %v301
        %334 = vset.pattern.permute.xlu0 1
        %335 = vperm.xlu0 %334, %v217
        %v336 = vpop.permute.xlu0 %335
        %338 = vset.pattern.permute.xlu0 1
        %339 = vperm.xlu0 %338, %v218
        %v340 = vpop.permute.xlu0 %339
        %342 = vset.pattern.permute.xlu0 1
        %343 = vperm.xlu0 %342, %v219
        %v344 = vpop.permute.xlu0 %343
        %346 = vset.pattern.permute.xlu0 1
        %347 = vperm.xlu0 %346, %v220
        %v348 = vpop.permute.xlu0 %347
        %350 = vset.pattern.permute.xlu0 1
        %351 = vperm.xlu0 %350, %v221
        %v352 = vpop.permute.xlu0 %351
        %354 = vset.pattern.permute.xlu0 1
        %355 = vperm.xlu0 %354, %v222
        %v356 = vpop.permute.xlu0 %355
        %358 = vset.pattern.permute.xlu0 1
        %359 = vperm.xlu0 %358, %v223
        %v360 = vpop.permute.xlu0 %359
        %362 = vset.pattern.permute.xlu0 1
        %363 = vperm.xlu0 %362, %v224
        %v364 = vpop.permute.xlu0 %363
        %v366 = vlaneseq
        %v367 = vshrl.u32 %v366, 7
        %v368 = vsub.s32 1, %v367
        %v369 = vrot.slane %v216, %v368
        %v370 = vlaneseq
        %v371 = vshrl.u32 %v370, 7
        %v372 = vsub.s32 3, %v371
        %v373 = vrot.slane %v216, %v372
        %v374 = vlaneseq
        %v375 = vshrl.u32 %v374, 7
        %v376 = vsub.s32 5, %v375
        %v377 = vrot.slane %v216, %v376
        %v378 = vlaneseq
        %v379 = vshrl.u32 %v378, 7
        %v380 = vsub.s32 7, %v379
        %v381 = vrot.slane %v216, %v380
        %v386 = vlaneseq
        %v387 = vshrl.u32 %v386, 7
        %v388 = vsub.s32 1, %v387
        %v389 = vrot.slane %v369, %v388
        %v390 = vlaneseq
        %v391 = vshrl.u32 %v390, 7
        %v392 = vsub.s32 1, %v391
        %v393 = vrot.slane %v373, %v392
        %v394 = vlaneseq
        %v395 = vshrl.u32 %v394, 7
        %v396 = vsub.s32 1, %v395
        %v397 = vrot.slane %v377, %v396
        %v398 = vlaneseq
        %v399 = vshrl.u32 %v398, 7
        %v400 = vsub.s32 1, %v399
        %v401 = vrot.slane %v381, %v400
        %v402 = vmul.f32 %v336, %v389
        %v403 = vmul.f32 %v336, %v393
        %v404 = vmul.f32 %v336, %v397
        %v405 = vmul.f32 %v336, %v401
        %v406 = vmul.f32 %v340, %v389
        %v407 = vmul.f32 %v340, %v393
        %v408 = vmul.f32 %v340, %v397
        %v409 = vmul.f32 %v340, %v401
        %v410 = vmul.f32 %v344, %v389
        %v411 = vmul.f32 %v344, %v393
        %v412 = vmul.f32 %v344, %v397
        %v413 = vmul.f32 %v344, %v401
        %v414 = vmul.f32 %v348, %v389
        %v415 = vmul.f32 %v348, %v393
        %v416 = vmul.f32 %v348, %v397
        %v417 = vmul.f32 %v348, %v401
        %v418 = vmul.f32 %v352, %v389
        %v419 = vmul.f32 %v352, %v393
        %v420 = vmul.f32 %v352, %v397
        %v421 = vmul.f32 %v352, %v401
        %v422 = vmul.f32 %v356, %v389
        %v423 = vmul.f32 %v356, %v393
        %v424 = vmul.f32 %v356, %v397
        %v425 = vmul.f32 %v356, %v401
        %v426 = vmul.f32 %v360, %v389
        %v427 = vmul.f32 %v360, %v393
        %v428 = vmul.f32 %v360, %v397
        %v429 = vmul.f32 %v360, %v401
        %v430 = vmul.f32 %v364, %v389
        %v431 = vmul.f32 %v364, %v393
        %v432 = vmul.f32 %v364, %v397
        %v433 = vmul.f32 %v364, %v401
        %v434 = vadd.f32 %v302, %v402
        %v435 = vadd.f32 %v303, %v403
        %v436 = vadd.f32 %v304, %v404
        %v437 = vadd.f32 %v305, %v405
        %v438 = vadd.f32 %v306, %v406
        %v439 = vadd.f32 %v307, %v407
        %v440 = vadd.f32 %v308, %v408
        %v441 = vadd.f32 %v309, %v409
        %v442 = vadd.f32 %v310, %v410
        %v443 = vadd.f32 %v311, %v411
        %v444 = vadd.f32 %v312, %v412
        %v445 = vadd.f32 %v313, %v413
        %v446 = vadd.f32 %v314, %v414
        %v447 = vadd.f32 %v315, %v415
        %v448 = vadd.f32 %v316, %v416
        %v449 = vadd.f32 %v317, %v417
        %v450 = vadd.f32 %v318, %v418
        %v451 = vadd.f32 %v319, %v419
        %v452 = vadd.f32 %v320, %v420
        %v453 = vadd.f32 %v321, %v421
        %v454 = vadd.f32 %v322, %v422
        %v455 = vadd.f32 %v323, %v423
        %v456 = vadd.f32 %v324, %v424
        %v457 = vadd.f32 %v325, %v425
        %v458 = vadd.f32 %v326, %v426
        %v459 = vadd.f32 %v327, %v427
        %v460 = vadd.f32 %v328, %v428
        %v461 = vadd.f32 %v329, %v429
        %v462 = vadd.f32 %v330, %v430
        %v463 = vadd.f32 %v331, %v431
        %v464 = vadd.f32 %v332, %v432
        %v465 = vadd.f32 %v333, %v433
        %466 = vset.pattern.permute.xlu0 2
        %467 = vperm.xlu0 %466, %v217
        %v468 = vpop.permute.xlu0 %467
        %470 = vset.pattern.permute.xlu0 2
        %471 = vperm.xlu0 %470, %v218
        %v472 = vpop.permute.xlu0 %471
        %474 = vset.pattern.permute.xlu0 2
        %475 = vperm.xlu0 %474, %v219
        %v476 = vpop.permute.xlu0 %475
        %478 = vset.pattern.permute.xlu0 2
        %479 = vperm.xlu0 %478, %v220
        %v480 = vpop.permute.xlu0 %479
        %482 = vset.pattern.permute.xlu0 2
        %483 = vperm.xlu0 %482, %v221
        %v484 = vpop.permute.xlu0 %483
        %486 = vset.pattern.permute.xlu0 2
        %487 = vperm.xlu0 %486, %v222
        %v488 = vpop.permute.xlu0 %487
        %490 = vset.pattern.permute.xlu0 2
        %491 = vperm.xlu0 %490, %v223
        %v492 = vpop.permute.xlu0 %491
        %494 = vset.pattern.permute.xlu0 2
        %495 = vperm.xlu0 %494, %v224
        %v496 = vpop.permute.xlu0 %495
        %v498 = vadd.f32 %v434, %v468
        %v499 = vadd.f32 %v435, %v468
        %v500 = vadd.f32 %v436, %v468
        %v501 = vadd.f32 %v437, %v468
        %v502 = vadd.f32 %v438, %v472
        %v503 = vadd.f32 %v439, %v472
        %v504 = vadd.f32 %v440, %v472
        %v505 = vadd.f32 %v441, %v472
        %v506 = vadd.f32 %v442, %v476
        %v507 = vadd.f32 %v443, %v476
        %v508 = vadd.f32 %v444, %v476
        %v509 = vadd.f32 %v445, %v476
        %v510 = vadd.f32 %v446, %v480
        %v511 = vadd.f32 %v447, %v480
        %v512 = vadd.f32 %v448, %v480
        %v513 = vadd.f32 %v449, %v480
        %v514 = vadd.f32 %v450, %v484
        %v515 = vadd.f32 %v451, %v484
        %v516 = vadd.f32 %v452, %v484
        %v517 = vadd.f32 %v453, %v484
        %v518 = vadd.f32 %v454, %v488
        %v519 = vadd.f32 %v455, %v488
        %v520 = vadd.f32 %v456, %v488
        %v521 = vadd.f32 %v457, %v488
        %v522 = vadd.f32 %v458, %v492
        %v523 = vadd.f32 %v459, %v492
        %v524 = vadd.f32 %v460, %v492
        %v525 = vadd.f32 %v461, %v492
        %v526 = vadd.f32 %v462, %v496
        %v527 = vadd.f32 %v463, %v496
        %v528 = vadd.f32 %v464, %v496
        %v529 = vadd.f32 %v465, %v496
        %v530 = vmax.f32 %v498, 0.0
        %v531 = vmax.f32 %v499, 0.0
        %v532 = vmax.f32 %v500, 0.0
        %v533 = vmax.f32 %v501, 0.0
        %v534 = vmax.f32 %v502, 0.0
        %v535 = vmax.f32 %v503, 0.0
        %v536 = vmax.f32 %v504, 0.0
        %v537 = vmax.f32 %v505, 0.0
        %v538 = vmax.f32 %v506, 0.0
        %v539 = vmax.f32 %v507, 0.0
        %v540 = vmax.f32 %v508, 0.0
        %v541 = vmax.f32 %v509, 0.0
        %v542 = vmax.f32 %v510, 0.0
        %v543 = vmax.f32 %v511, 0.0
        %v544 = vmax.f32 %v512, 0.0
        %v545 = vmax.f32 %v513, 0.0
        %v546 = vmax.f32 %v514, 0.0
        %v547 = vmax.f32 %v515, 0.0
        %v548 = vmax.f32 %v516, 0.0
        %v549 = vmax.f32 %v517, 0.0
        %v550 = vmax.f32 %v518, 0.0
        %v551 = vmax.f32 %v519, 0.0
        %v552 = vmax.f32 %v520, 0.0
        %v553 = vmax.f32 %v521, 0.0
        %v554 = vmax.f32 %v522, 0.0
        %v555 = vmax.f32 %v523, 0.0
        %v556 = vmax.f32 %v524, 0.0
        %v557 = vmax.f32 %v525, 0.0
        %v558 = vmax.f32 %v526, 0.0
        %v559 = vmax.f32 %v527, 0.0
        %v560 = vmax.f32 %v528, 0.0
        %v561 = vmax.f32 %v529, 0.0
        %v562 = vld [vmem:[%s2] sm:$0xff]
        %v563 = vld [vmem:[%s2 + $0x8] sm:$0xff]
        %v564 = vld [vmem:[%s2 + $0x10] sm:$0xff]
        %v565 = vld [vmem:[%s2 + $0x18] sm:$0xff]
        %v566 = vld [vmem:[%s2 + $0x20] sm:$0xff]
        %v567 = vld [vmem:[%s2 + $0x28] sm:$0xff]
        %v568 = vld [vmem:[%s2 + $0x30] sm:$0xff]
        %v569 = vld [vmem:[%s2 + $0x38] sm:$0xff]
        %570 = vset.pattern.permute.xlu0 3
        %571 = vperm.xlu0 %570, %v217
        %v572 = vpop.permute.xlu0 %571
        %574 = vset.pattern.permute.xlu0 3
        %575 = vperm.xlu0 %574, %v218
        %v576 = vpop.permute.xlu0 %575
        %578 = vset.pattern.permute.xlu0 3
        %579 = vperm.xlu0 %578, %v219
        %v580 = vpop.permute.xlu0 %579
        %582 = vset.pattern.permute.xlu0 3
        %583 = vperm.xlu0 %582, %v220
        %v584 = vpop.permute.xlu0 %583
        %586 = vset.pattern.permute.xlu0 3
        %587 = vperm.xlu0 %586, %v221
        %v588 = vpop.permute.xlu0 %587
        %590 = vset.pattern.permute.xlu0 3
        %591 = vperm.xlu0 %590, %v222
        %v592 = vpop.permute.xlu0 %591
        %594 = vset.pattern.permute.xlu0 3
        %595 = vperm.xlu0 %594, %v223
        %v596 = vpop.permute.xlu0 %595
        %598 = vset.pattern.permute.xlu0 3
        %599 = vperm.xlu0 %598, %v224
        %v600 = vpop.permute.xlu0 %599
        %vm602 = vcmask 523264
        %v604 = vsel %vm602, %v562, 0
        %v607 = vsel %vm602, %v563, 0
        %v610 = vsel %vm602, %v564, 0
        %v613 = vsel %vm602, %v565, 0
        %v616 = vsel %vm602, %v566, 0
        %v619 = vsel %vm602, %v567, 0
        %v622 = vsel %vm602, %v568, 0
        %v625 = vsel %vm602, %v569, 0
        %627 = vmatprep.subr.mxu0 %v531
        %628 = vmatpush1.msra.mxu0 %v530
        %629 = vmatprep.subr.mxu0 %v535
        %630 = vmatpush1.msra.mxu0 %v534
        %631 = vmatprep.subr.mxu0 %v539
        %632 = vmatpush1.msra.mxu0 %v538
        %633 = vmatprep.subr.mxu0 %v543
        %634 = vmatpush1.msra.mxu0 %v542
        %635 = vmatprep.subr.mxu0 %v547
        %636 = vmatpush1.msra.mxu0 %v546
        %637 = vmatprep.subr.mxu0 %v551
        %638 = vmatpush1.msra.mxu0 %v550
        %639 = vmatprep.subr.mxu0 %v555
        %640 = vmatpush1.msra.mxu0 %v554
        %641 = vmatprep.subr.mxu0 %v559
        %642 = vmatpush1.msra.mxu0 %v558
        %643 = vmatprep.subr.mxu0 0.0
        %644 = vmatpush1.msra.mxu0 0.0
        %645 = vmatprep.subr.mxu0 0.0
        %646 = vmatpush1.msra.mxu0 0.0
        %647 = vmatprep.subr.mxu0 0.0
        %648 = vmatpush1.msra.mxu0 0.0
        %649 = vmatprep.subr.mxu0 0.0
        %650 = vmatpush1.msra.mxu0 0.0
        %651 = vmatprep.subr.mxu0 0.0
        %652 = vmatpush1.msra.mxu0 0.0
        %653 = vmatprep.subr.mxu0 0.0
        %654 = vmatpush1.msra.mxu0 0.0
        %655 = vmatprep.subr.mxu0 0.0
        %656 = vmatpush1.msra.mxu0 0.0
        %657 = vmatprep.subr.mxu0 0.0
        %658 = vmatpush1.msra.mxu0 0.0
        %659 = vmatprep.subr.mxu0 0.0
        %660 = vmatpush1.msra.mxu0 0.0
        %661 = vmatprep.subr.mxu0 0.0
        %662 = vmatpush1.msra.mxu0 0.0
        %663 = vmatprep.subr.mxu0 0.0
        %664 = vmatpush1.msra.mxu0 0.0
        %665 = vmatprep.subr.mxu0 0.0
        %666 = vmatpush1.msra.mxu0 0.0
        %667 = vmatprep.subr.mxu0 0.0
        %668 = vmatpush1.msra.mxu0 0.0
        %669 = vmatprep.subr.mxu0 0.0
        %670 = vmatpush1.msra.mxu0 0.0
        %671 = vmatprep.subr.mxu0 0.0
        %672 = vmatpush1.msra.mxu0 0.0
        %673 = vmatprep.subr.mxu0 0.0
        %674 = vmatpush1.msra.mxu0 0.0
        %675 = vmatprep.subr.mxu0 0.0
        %676 = vmatpush1.msra.mxu0 0.0
        %677 = vmatprep.subr.mxu0 0.0
        %678 = vmatpush1.msra.mxu0 0.0
        %679 = vmatprep.subr.mxu0 0.0
        %680 = vmatpush1.msra.mxu0 0.0
        %681 = vmatprep.subr.mxu0 0.0
        %682 = vmatpush1.msra.mxu0 0.0
        %683 = vmatprep.subr.mxu0 0.0
        %684 = vmatpush1.msra.mxu0 0.0
        %685 = vmatprep.subr.mxu0 0.0
        %686 = vmatpush1.msra.mxu0 0.0
        %687 = vmatprep.subr.mxu0 0.0
        %688 = vmatpush1.msra.mxu0 0.0
        %689 = vmatprep.subr.mxu0 0.0
        %690 = vmatpush1.msra.mxu0 0.0
        %691 = vmatprep.mubr.f32.mxu0 0.0
        %692 = vmatmul.mubr.f32.gmra.mrb[0].mxu0 %v604
        %v693 = vpop.f32.mrb[0].mxu0
        %v694 = vadd.f32 %v572, %v693
        %v695 = vpop.f32.mrb[0].mxu0
        %v696 = vadd.f32 %v572, %v695
        %697 = vmatprep.mubr.f32.mxu0 0.0
        %698 = vmatmul.mubr.f32.gmra.mrb[0].mxu0 %v607
        %v699 = vpop.f32.mrb[0].mxu0
        %v700 = vadd.f32 %v576, %v699
        %v701 = vpop.f32.mrb[0].mxu0
        %v702 = vadd.f32 %v576, %v701
        %703 = vmatprep.mubr.f32.mxu0 0.0
        %704 = vmatmul.mubr.f32.gmra.mrb[0].mxu0 %v610
        %v705 = vpop.f32.mrb[0].mxu0
        %v706 = vadd.f32 %v580, %v705
        %v707 = vpop.f32.mrb[0].mxu0
        %v708 = vadd.f32 %v580, %v707
        %709 = vmatprep.mubr.f32.mxu0 0.0
        %710 = vmatmul.mubr.f32.gmra.mrb[0].mxu0 %v613
        %v711 = vpop.f32.mrb[0].mxu0
        %v712 = vadd.f32 %v584, %v711
        %v713 = vpop.f32.mrb[0].mxu0
        %v714 = vadd.f32 %v584, %v713
        %715 = vmatprep.mubr.f32.mxu0 0.0
        %716 = vmatmul.mubr.f32.gmra.mrb[0].mxu0 %v616
        %v717 = vpop.f32.mrb[0].mxu0
        %v718 = vadd.f32 %v588, %v717
        %v719 = vpop.f32.mrb[0].mxu0
        %v720 = vadd.f32 %v588, %v719
        %721 = vmatprep.mubr.f32.mxu0 0.0
        %722 = vmatmul.mubr.f32.gmra.mrb[0].mxu0 %v619
        %v723 = vpop.f32.mrb[0].mxu0
        %v724 = vadd.f32 %v592, %v723
        %v725 = vpop.f32.mrb[0].mxu0
        %v726 = vadd.f32 %v592, %v725
        %727 = vmatprep.mubr.f32.mxu0 0.0
        %728 = vmatmul.mubr.f32.gmra.mrb[0].mxu0 %v622
        %v729 = vpop.f32.mrb[0].mxu0
        %v730 = vadd.f32 %v596, %v729
        %v731 = vpop.f32.mrb[0].mxu0
        %v732 = vadd.f32 %v596, %v731
        %733 = vmatprep.mubr.f32.mxu0 0.0
        %734 = vmatmul.mubr.f32.gmra.mrb[0].mxu0 %v625
        %v735 = vpop.f32.mrb[0].mxu0
        %v736 = vadd.f32 %v600, %v735
        %v737 = vpop.f32.mrb[0].mxu0
        %v738 = vadd.f32 %v600, %v737
        %739 = vdwg.mxu0
        %740 = vmatprep.subr.mxu0 %v533
        %741 = vmatpush1.msra.mxu0 %v532
        %742 = vmatprep.subr.mxu0 %v537
        %743 = vmatpush1.msra.mxu0 %v536
        %744 = vmatprep.subr.mxu0 %v541
        %745 = vmatpush1.msra.mxu0 %v540
        %746 = vmatprep.subr.mxu0 %v545
        %747 = vmatpush1.msra.mxu0 %v544
        %748 = vmatprep.subr.mxu0 %v549
        %749 = vmatpush1.msra.mxu0 %v548
        %750 = vmatprep.subr.mxu0 %v553
        %751 = vmatpush1.msra.mxu0 %v552
        %752 = vmatprep.subr.mxu0 %v557
        %753 = vmatpush1.msra.mxu0 %v556
        %754 = vmatprep.subr.mxu0 %v561
        %755 = vmatpush1.msra.mxu0 %v560
        %756 = vmatprep.subr.mxu0 0.0
        %757 = vmatpush1.msra.mxu0 0.0
        %758 = vmatprep.subr.mxu0 0.0
        %759 = vmatpush1.msra.mxu0 0.0
        %760 = vmatprep.subr.mxu0 0.0
        %761 = vmatpush1.msra.mxu0 0.0
        %762 = vmatprep.subr.mxu0 0.0
        %763 = vmatpush1.msra.mxu0 0.0
        %764 = vmatprep.subr.mxu0 0.0
        %765 = vmatpush1.msra.mxu0 0.0
        %766 = vmatprep.subr.mxu0 0.0
        %767 = vmatpush1.msra.mxu0 0.0
        %768 = vmatprep.subr.mxu0 0.0
        %769 = vmatpush1.msra.mxu0 0.0
        %770 = vmatprep.subr.mxu0 0.0
        %771 = vmatpush1.msra.mxu0 0.0
        %772 = vmatprep.subr.mxu0 0.0
        %773 = vmatpush1.msra.mxu0 0.0
        %774 = vmatprep.subr.mxu0 0.0
        %775 = vmatpush1.msra.mxu0 0.0
        %776 = vmatprep.subr.mxu0 0.0
        %777 = vmatpush1.msra.mxu0 0.0
        %778 = vmatprep.subr.mxu0 0.0
        %779 = vmatpush1.msra.mxu0 0.0
        %780 = vmatprep.subr.mxu0 0.0
        %781 = vmatpush1.msra.mxu0 0.0
        %782 = vmatprep.subr.mxu0 0.0
        %783 = vmatpush1.msra.mxu0 0.0
        %784 = vmatprep.subr.mxu0 0.0
        %785 = vmatpush1.msra.mxu0 0.0
        %786 = vmatprep.subr.mxu0 0.0
        %787 = vmatpush1.msra.mxu0 0.0
        %788 = vmatprep.subr.mxu0 0.0
        %789 = vmatpush1.msra.mxu0 0.0
        %790 = vmatprep.subr.mxu0 0.0
        %791 = vmatpush1.msra.mxu0 0.0
        %792 = vmatprep.subr.mxu0 0.0
        %793 = vmatpush1.msra.mxu0 0.0
        %794 = vmatprep.subr.mxu0 0.0
        %795 = vmatpush1.msra.mxu0 0.0
        %796 = vmatprep.subr.mxu0 0.0
        %797 = vmatpush1.msra.mxu0 0.0
        %798 = vmatprep.subr.mxu0 0.0
        %799 = vmatpush1.msra.mxu0 0.0
        %800 = vmatprep.subr.mxu0 0.0
        %801 = vmatpush1.msra.mxu0 0.0
        %802 = vmatprep.subr.mxu0 0.0
        %803 = vmatpush1.msra.mxu0 0.0
        %804 = vmatprep.mubr.f32.mxu0 0.0
        %805 = vmatmul.mubr.f32.gmra.mrb[0].mxu0 %v604
        %v806 = vpop.f32.mrb[0].mxu0
        %v807 = vadd.f32 %v572, %v806
        %v808 = vpop.f32.mrb[0].mxu0
        %v809 = vadd.f32 %v572, %v808
        %810 = vmatprep.mubr.f32.mxu0 0.0
        %811 = vmatmul.mubr.f32.gmra.mrb[0].mxu0 %v607
        %v812 = vpop.f32.mrb[0].mxu0
        %v813 = vadd.f32 %v576, %v812
        %v814 = vpop.f32.mrb[0].mxu0
        %v815 = vadd.f32 %v576, %v814
        %816 = vmatprep.mubr.f32.mxu0 0.0
        %817 = vmatmul.mubr.f32.gmra.mrb[0].mxu0 %v610
        %v818 = vpop.f32.mrb[0].mxu0
        %v819 = vadd.f32 %v580, %v818
        %v820 = vpop.f32.mrb[0].mxu0
        %v821 = vadd.f32 %v580, %v820
        %822 = vmatprep.mubr.f32.mxu0 0.0
        %823 = vmatmul.mubr.f32.gmra.mrb[0].mxu0 %v613
        %v824 = vpop.f32.mrb[0].mxu0
        %v825 = vadd.f32 %v584, %v824
        %v826 = vpop.f32.mrb[0].mxu0
        %v827 = vadd.f32 %v584, %v826
        %828 = vmatprep.mubr.f32.mxu0 0.0
        %829 = vmatmul.mubr.f32.gmra.mrb[0].mxu0 %v616
        %v830 = vpop.f32.mrb[0].mxu0
        %v831 = vadd.f32 %v588, %v830
        %v832 = vpop.f32.mrb[0].mxu0
        %v833 = vadd.f32 %v588, %v832
        %834 = vmatprep.mubr.f32.mxu0 0.0
        %835 = vmatmul.mubr.f32.gmra.mrb[0].mxu0 %v619
        %v836 = vpop.f32.mrb[0].mxu0
        %v837 = vadd.f32 %v592, %v836
        %v838 = vpop.f32.mrb[0].mxu0
        %v839 = vadd.f32 %v592, %v838
        %840 = vmatprep.mubr.f32.mxu0 0.0
        %841 = vmatmul.mubr.f32.gmra.mrb[0].mxu0 %v622
        %v842 = vpop.f32.mrb[0].mxu0
        %v843 = vadd.f32 %v596, %v842
        %v844 = vpop.f32.mrb[0].mxu0
        %v845 = vadd.f32 %v596, %v844
        %846 = vmatprep.mubr.f32.mxu0 0.0
        %847 = vmatmul.mubr.f32.gmra.mrb[0].mxu0 %v625
        %v848 = vpop.f32.mrb[0].mxu0
        %v849 = vadd.f32 %v600, %v848
        %v850 = vpop.f32.mrb[0].mxu0
        %v851 = vadd.f32 %v600, %v850
        %852 = vdwg.mxu0
        %v853 = vmax.f32 %v694, 0.0
        %v854 = vmax.f32 %v696, 0.0
        %v855 = vmax.f32 %v807, 0.0
        %v856 = vmax.f32 %v809, 0.0
        %v857 = vmax.f32 %v700, 0.0
        %v858 = vmax.f32 %v702, 0.0
        %v859 = vmax.f32 %v813, 0.0
        %v860 = vmax.f32 %v815, 0.0
        %v861 = vmax.f32 %v706, 0.0
        %v862 = vmax.f32 %v708, 0.0
        %v863 = vmax.f32 %v819, 0.0
        %v864 = vmax.f32 %v821, 0.0
        %v865 = vmax.f32 %v712, 0.0
        %v866 = vmax.f32 %v714, 0.0
        %v867 = vmax.f32 %v825, 0.0
        %v868 = vmax.f32 %v827, 0.0
        %v869 = vmax.f32 %v718, 0.0
        %v870 = vmax.f32 %v720, 0.0
        %v871 = vmax.f32 %v831, 0.0
        %v872 = vmax.f32 %v833, 0.0
        %v873 = vmax.f32 %v724, 0.0
        %v874 = vmax.f32 %v726, 0.0
        %v875 = vmax.f32 %v837, 0.0
        %v876 = vmax.f32 %v839, 0.0
        %v877 = vmax.f32 %v730, 0.0
        %v878 = vmax.f32 %v732, 0.0
        %v879 = vmax.f32 %v843, 0.0
        %v880 = vmax.f32 %v845, 0.0
        %v881 = vmax.f32 %v736, 0.0
        %v882 = vmax.f32 %v738, 0.0
        %v883 = vmax.f32 %v849, 0.0
        %v884 = vmax.f32 %v851, 0.0
        %v885 = vld [vmem:[%s3] sm:$0xff]
        %887 = vset.pattern.permute.xlu0 64
        %888 = vperm.xlu0 %887, %v885
        %v889 = vpop.permute.xlu0 %888
        %v891 = vsel %vm602, %v885, 0
        %893 = vmatprep.subr.mxu0 %v854
        %894 = vmatpush1.msra.mxu0 %v853
        %895 = vmatprep.subr.mxu0 %v858
        %896 = vmatpush1.msra.mxu0 %v857
        %897 = vmatprep.subr.mxu0 %v862
        %898 = vmatpush1.msra.mxu0 %v861
        %899 = vmatprep.subr.mxu0 %v866
        %900 = vmatpush1.msra.mxu0 %v865
        %901 = vmatprep.subr.mxu0 %v870
        %902 = vmatpush1.msra.mxu0 %v869
        %903 = vmatprep.subr.mxu0 %v874
        %904 = vmatpush1.msra.mxu0 %v873
        %905 = vmatprep.subr.mxu0 %v878
        %906 = vmatpush1.msra.mxu0 %v877
        %907 = vmatprep.subr.mxu0 %v882
        %908 = vmatpush1.msra.mxu0 %v881
        %909 = vmatprep.subr.mxu0 0.0
        %910 = vmatpush1.msra.mxu0 0.0
        %911 = vmatprep.subr.mxu0 0.0
        %912 = vmatpush1.msra.mxu0 0.0
        %913 = vmatprep.subr.mxu0 0.0
        %914 = vmatpush1.msra.mxu0 0.0
        %915 = vmatprep.subr.mxu0 0.0
        %916 = vmatpush1.msra.mxu0 0.0
        %917 = vmatprep.subr.mxu0 0.0
        %918 = vmatpush1.msra.mxu0 0.0
        %919 = vmatprep.subr.mxu0 0.0
        %920 = vmatpush1.msra.mxu0 0.0
        %921 = vmatprep.subr.mxu0 0.0
        %922 = vmatpush1.msra.mxu0 0.0
        %923 = vmatprep.subr.mxu0 0.0
        %924 = vmatpush1.msra.mxu0 0.0
        %925 = vmatprep.subr.mxu0 0.0
        %926 = vmatpush1.msra.mxu0 0.0
        %927 = vmatprep.subr.mxu0 0.0
        %928 = vmatpush1.msra.mxu0 0.0
        %929 = vmatprep.subr.mxu0 0.0
        %930 = vmatpush1.msra.mxu0 0.0
        %931 = vmatprep.subr.mxu0 0.0
        %932 = vmatpush1.msra.mxu0 0.0
        %933 = vmatprep.subr.mxu0 0.0
        %934 = vmatpush1.msra.mxu0 0.0
        %935 = vmatprep.subr.mxu0 0.0
        %936 = vmatpush1.msra.mxu0 0.0
        %937 = vmatprep.subr.mxu0 0.0
        %938 = vmatpush1.msra.mxu0 0.0
        %939 = vmatprep.subr.mxu0 0.0
        %940 = vmatpush1.msra.mxu0 0.0
        %941 = vmatprep.subr.mxu0 0.0
        %942 = vmatpush1.msra.mxu0 0.0
        %943 = vmatprep.subr.mxu0 0.0
        %944 = vmatpush1.msra.mxu0 0.0
        %945 = vmatprep.subr.mxu0 0.0
        %946 = vmatpush1.msra.mxu0 0.0
        %947 = vmatprep.subr.mxu0 0.0
        %948 = vmatpush1.msra.mxu0 0.0
        %949 = vmatprep.subr.mxu0 0.0
        %950 = vmatpush1.msra.mxu0 0.0
        %951 = vmatprep.subr.mxu0 0.0
        %952 = vmatpush1.msra.mxu0 0.0
        %953 = vmatprep.subr.mxu0 0.0
        %954 = vmatpush1.msra.mxu0 0.0
        %955 = vmatprep.subr.mxu0 0.0
        %956 = vmatpush1.msra.mxu0 0.0
        %957 = vmatprep.mubr.f32.mxu0 0.0
        %958 = vmatmul.mubr.f32.gmra.mrb[0].mxu0 %v891
        %v959 = vpop.f32.mrb[0].mxu0
        %v960 = vadd.f32 %v889, %v959
        %v961 = vpop.f32.mrb[0].mxu0
        %v962 = vadd.f32 %v889, %v961
        %963 = vdwg.mxu0
        %964 = vmatprep.subr.mxu0 %v856
        %965 = vmatpush1.msra.mxu0 %v855
        %966 = vmatprep.subr.mxu0 %v860
        %967 = vmatpush1.msra.mxu0 %v859
        %968 = vmatprep.subr.mxu0 %v864
        %969 = vmatpush1.msra.mxu0 %v863
        %970 = vmatprep.subr.mxu0 %v868
        %971 = vmatpush1.msra.mxu0 %v867
        %972 = vmatprep.subr.mxu0 %v872
        %973 = vmatpush1.msra.mxu0 %v871
        %974 = vmatprep.subr.mxu0 %v876
        %975 = vmatpush1.msra.mxu0 %v875
        %976 = vmatprep.subr.mxu0 %v880
        %977 = vmatpush1.msra.mxu0 %v879
        %978 = vmatprep.subr.mxu0 %v884
        %979 = vmatpush1.msra.mxu0 %v883
        %980 = vmatprep.subr.mxu0 0.0
        %981 = vmatpush1.msra.mxu0 0.0
        %982 = vmatprep.subr.mxu0 0.0
        %983 = vmatpush1.msra.mxu0 0.0
        %984 = vmatprep.subr.mxu0 0.0
        %985 = vmatpush1.msra.mxu0 0.0
        %986 = vmatprep.subr.mxu0 0.0
        %987 = vmatpush1.msra.mxu0 0.0
        %988 = vmatprep.subr.mxu0 0.0
        %989 = vmatpush1.msra.mxu0 0.0
        %990 = vmatprep.subr.mxu0 0.0
        %991 = vmatpush1.msra.mxu0 0.0
        %992 = vmatprep.subr.mxu0 0.0
        %993 = vmatpush1.msra.mxu0 0.0
        %994 = vmatprep.subr.mxu0 0.0
        %995 = vmatpush1.msra.mxu0 0.0
        %996 = vmatprep.subr.mxu0 0.0
        %997 = vmatpush1.msra.mxu0 0.0
        %998 = vmatprep.subr.mxu0 0.0
        %999 = vmatpush1.msra.mxu0 0.0
        %1000 = vmatprep.subr.mxu0 0.0
        %1001 = vmatpush1.msra.mxu0 0.0
        %1002 = vmatprep.subr.mxu0 0.0
        %1003 = vmatpush1.msra.mxu0 0.0
        %1004 = vmatprep.subr.mxu0 0.0
        %1005 = vmatpush1.msra.mxu0 0.0
        %1006 = vmatprep.subr.mxu0 0.0
        %1007 = vmatpush1.msra.mxu0 0.0
        %1008 = vmatprep.subr.mxu0 0.0
        %1009 = vmatpush1.msra.mxu0 0.0
        %1010 = vmatprep.subr.mxu0 0.0
        %1011 = vmatpush1.msra.mxu0 0.0
        %1012 = vmatprep.subr.mxu0 0.0
        %1013 = vmatpush1.msra.mxu0 0.0
        %1014 = vmatprep.subr.mxu0 0.0
        %1015 = vmatpush1.msra.mxu0 0.0
        %1016 = vmatprep.subr.mxu0 0.0
        %1017 = vmatpush1.msra.mxu0 0.0
        %1018 = vmatprep.subr.mxu0 0.0
        %1019 = vmatpush1.msra.mxu0 0.0
        %1020 = vmatprep.subr.mxu0 0.0
        %1021 = vmatpush1.msra.mxu0 0.0
        %1022 = vmatprep.subr.mxu0 0.0
        %1023 = vmatpush1.msra.mxu0 0.0
        %1024 = vmatprep.subr.mxu0 0.0
        %1025 = vmatpush1.msra.mxu0 0.0
        %1026 = vmatprep.subr.mxu0 0.0
        %1027 = vmatpush1.msra.mxu0 0.0
        %1028 = vmatprep.mubr.f32.mxu0 0.0
        %1029 = vmatmul.mubr.f32.gmra.mrb[0].mxu0 %v891
        %v1030 = vpop.f32.mrb[0].mxu0
        %v1031 = vadd.f32 %v889, %v1030
        %v1032 = vpop.f32.mrb[0].mxu0
        %v1033 = vadd.f32 %v889, %v1032
        %1034 = vdwg.mxu0
        %1035 = vst [vmem:[%s213] sm:$0xff] %v960
        %1036 = vst [vmem:[%s213 + $0x8] sm:$0xff] %v962
        %1037 = vst [vmem:[%s213 + $0x10] sm:$0xff] %v1031
        %1038 = vst [vmem:[%s213 + $0x18] sm:$0xff] %v1033
        %s1039 = sand.u32 %s118, 1
        %s1040 = scalar_lea.sflag [#allocation4], %s1039
        %s1041 = sand.u32 %s118, 1
        %s1042 = smul.addr %s1041, 32
        %s1043 = scalar_lea.vmem [#allocation5], %s1042
        // Predicated region
        $region41: #{tpu_custom_call.1} parent=35 // pred_check
          %p1044 = pneg %p128
        $region42: #{tpu_custom_call.1} parent=35 // pred_check_branch
          %1046 = sbr.rel (%p1044) target = $region44
        $region43: #{tpu_custom_call.1} parent=35 // pred_region
          %s1047 = smul.u32 4, %s21
          %s1049 = ssub.s32 512, 512
          %1050 = vsyncadd %s1040, %s1049
          %s1051 = smul.addr %s1047, 128
          %s1052 = scalar_lea.hbm %s4, %s1051
          %s1054 = sshll.u32 %s1043, 4
          %s1055 = int_to_ptr.vmem [resolvable:$true] %s1054
          %1057 = dma.vmem_to_hbm [thread:$0]  %s1055, 512, %s1052, %s1040
        $region44: #{tpu_custom_call.1} parent=35 // pred_fallthru
          _
      $region36: #{tpu_custom_call.1} parent=5 // pred_fallthru
        _
      %p1058 = scmp.le.s32.totalorder 2, %s16
      // Predicated region
      $region45: #{tpu_custom_call.1} parent=5 // pred_check
        %p1059 = pneg %p1058
      $region46: #{tpu_custom_call.1} parent=5 // pred_check_branch
        %1061 = sbr.rel (%p1059) target = $region48
      $region47: #{tpu_custom_call.1} parent=5 // pred_region
        %s1062 = ssub.s32 %s16, 2
        // Predicated region
        $region49: #{tpu_custom_call.1} parent=47 // pred_check
          %p1063 = pneg %p134
        $region50: #{tpu_custom_call.1} parent=47 // pred_check_branch
          %1065 = sbr.rel (%p1063) target = $region52
        $region51: #{tpu_custom_call.1} parent=47 // pred_region
          %s1066 = sand.u32 %s119, 1
          %s1067 = scalar_lea.sflag [#allocation4], %s1066
          %s1068 = sand.u32 %s119, 1
          %s1069 = smul.addr %s1068, 32
          %s1070 = scalar_lea.vmem [#allocation5], %s1069
          %1071 = dma.done %s1067, 512
        $region52: #{tpu_custom_call.1} parent=47 // pred_fallthru
          _
      $region48: #{tpu_custom_call.1} parent=5 // pred_fallthru
        _
    $region6: #{tpu_custom_call.1} parent=1 // loop_footer
      %s20 = sadd.s32 1, %s16
    $region7: #{tpu_custom_call.1} parent=1 // loop_footer_branch
      %15 = sbr.rel target = $region3
    $region8: #{tpu_custom_call.1} parent=1 // loop_exit
      _
    %1072 = vsyncpa [#allocation3], 1
    %s1073 = scalar_lea.sflag [#allocation3], 1
    %1074 = vsyncpa %s1073, 1
    %1075 = vsyncpa [#allocation4], 1
    %s1076 = scalar_lea.sflag [#allocation4], 1
    %1077 = vsyncpa %s1076, 1

</llo_original>
